<compile_context>
chip_gen: v5e
topology: v5e:2x2
jax: 0.10.0
libtpu: 0.0.40
codegen_flags: <defaults>
</compile_context>

<pallas_src>
import math

import jax
import jax.numpy as jnp
from jax.experimental import pallas as pl
from jax.experimental.pallas import tpu as pltpu

_HIDDEN = 256
_SUBLANE = 8     # TPU sublane width


def _round_up(x, m):
    return ((x + m - 1) // m) * m


# ----------------------------------------------------------------------------
# Single-critic kernel
# ----------------------------------------------------------------------------
def qnetwork_kernel(x_ref, a_ref, w1x_ref, w1a_ref, b1_ref, w2_ref, b2_ref,
                    w3_ref, b3_ref, out_ref):
    # fc1 as two split-row matmuls (no concat / feature padding needed).
    h = jnp.dot(x_ref[...], w1x_ref[...], preferred_element_type=jnp.float32)
    h = h + jnp.dot(a_ref[...], w1a_ref[...], preferred_element_type=jnp.float32)
    h = jnp.maximum(h + b1_ref[...], 0.0)
    # fc2 + ReLU (bf16 MXU inputs, f32 accumulation).
    h = jnp.dot(h.astype(jnp.bfloat16), w2_ref[...],
                preferred_element_type=jnp.float32)
    h = jnp.maximum(h + b2_ref[...], 0.0)
    # fc3: single output column -> VPU multiply + lane reduce (no zero-padded
    # MXU columns, and the output writeback is a true (tb, 1) column).
    out_ref[...] = jnp.sum(h * w3_ref[...], axis=-1, keepdims=True) + b3_ref[...]


def _choose_batch_tile(B, tile_b):
    tb = max(_SUBLANE, min(tile_b, _round_up(B, _SUBLANE)))
    if B >= 512:
        # Ensure >= 2 grid steps so both v7x TensorCores get work.
        tb = min(tb, _round_up((B + 1) // 2, _SUBLANE))
    return tb


def _batch_input_specs(tb, n_obs, n_act, n_steps):
    idx = lambda i: (i, 0)
    if n_steps > 2:
        # Deeper input buffering hides the exposed x/a DMA (mainly helps v5e).
        return [pl.BlockSpec((tb, n_obs), idx, pipeline_mode=pl.Buffered(3)),
                pl.BlockSpec((tb, n_act), idx, pipeline_mode=pl.Buffered(3))]
    return [pl.BlockSpec((tb, n_obs), idx),
            pl.BlockSpec((tb, n_act), idx)]


def qnetwork_forward(x, a, params, *, tile_b=1024):
    """x: [B, n_obs], a: [B, n_act] -> q: [B, 1] f32."""
    B, n_obs = x.shape
    n_act = a.shape[1]
    w1x, w1a, b1 = params["w1x"], params["w1a"], params["b1"]
    w2, b2 = params["w2"], params["b2"]
    w3, b3 = params["w3"], params["b3"]
    hidden = w2.shape[0]

    # Cast activations to bf16 in the wrapper: halves the dominant HBM read and
    # the in-kernel MXU-feed cast becomes a no-op.
    x = x.astype(jnp.bfloat16)
    a = a.astype(jnp.bfloat16)

    tb = _choose_batch_tile(B, tile_b)
    b_pad = _round_up(B, tb)
    if b_pad != B:
        pad = ((0, b_pad - B), (0, 0))
        x = jnp.pad(x, pad)
        a = jnp.pad(a, pad)
    grid = (b_pad // tb,)

    # Real (unpadded) cost for XLA's scheduler.
    n_in = n_obs + n_act
    flops = 2 * B * (n_in * hidden + hidden * hidden + hidden)
    bytes_accessed = (
        2 * B * n_in                                  # x, a (bf16)
        + 2 * (n_in * hidden + hidden * hidden)       # bf16 weights
        + 4 * (hidden + hidden + hidden + 1)          # f32 biases + w3 + b3
        + 4 * B                                       # out (f32, 1 column)
    )

    out = pl.pallas_call(
        qnetwork_kernel,
        out_shape=jax.ShapeDtypeStruct((b_pad, 1), jnp.float32),
        grid_spec=pltpu.PrefetchScalarGridSpec(
            num_scalar_prefetch=0,
            grid=grid,
            in_specs=_batch_input_specs(tb, n_obs, n_act, grid[0]) + [
                pl.BlockSpec((n_obs, hidden), lambda i: (0, 0)),   # w1x resident
                pl.BlockSpec((n_act, hidden), lambda i: (0, 0)),   # w1a resident
                pl.BlockSpec((1, hidden), lambda i: (0, 0)),       # b1
                pl.BlockSpec((hidden, hidden), lambda i: (0, 0)),  # w2 resident
                pl.BlockSpec((1, hidden), lambda i: (0, 0)),       # b2
                pl.BlockSpec((1, hidden), lambda i: (0, 0)),       # w3 (row)
                pl.BlockSpec((1, 1), lambda i: (0, 0)),            # b3
            ],
            out_specs=pl.BlockSpec((tb, 1), lambda i: (i, 0)),
        ),
        compiler_params=pltpu.CompilerParams(
            dimension_semantics=("parallel",)),
        cost_estimate=pl.CostEstimate(
            flops=flops, transcendentals=0, bytes_accessed=bytes_accessed),
    )(x, a, w1x, w1a, b1, w2, b2, w3, b3)

    return out[:B] if b_pad != B else out


# ----------------------------------------------------------------------------
# Twin-critic (q1, q2) fused kernel: one launch, one x/a read.
# ----------------------------------------------------------------------------
def twin_qnetwork_kernel(x_ref, a_ref, w1x_ref, w1a_ref, b1_ref, w2_ref,
                         b2_ref, w3_ref, b3_ref, out_ref):
    x = x_ref[...]
    a = a_ref[...]
    for c in range(2):   # statically unrolled; both critics share one x/a DMA
        h = jnp.dot(x, w1x_ref[c], preferred_element_type=jnp.float32)
        h = h + jnp.dot(a, w1a_ref[c], preferred_element_type=jnp.float32)
        h = jnp.maximum(h + b1_ref[c], 0.0)
        h = jnp.dot(h.astype(jnp.bfloat16), w2_ref[c],
                    preferred_element_type=jnp.float32)
        h = jnp.maximum(h + b2_ref[c], 0.0)
        out_ref[c] = jnp.sum(h * w3_ref[c], axis=-1, keepdims=True) + b3_ref[c]


def twin_qnetwork_forward(x, a, twin_params, *, tile_b=1024):
    """Fused TD3 critics: returns (q1, q2), each [B, 1] f32."""
    B, n_obs = x.shape
    n_act = a.shape[1]
    w1x, w1a, b1 = twin_params["w1x"], twin_params["w1a"], twin_params["b1"]
    w2, b2 = twin_params["w2"], twin_params["b2"]
    w3, b3 = twin_params["w3"], twin_params["b3"]
    hidden = w2.shape[-1]

    x = x.astype(jnp.bfloat16)
    a = a.astype(jnp.bfloat16)

    tb = _choose_batch_tile(B, tile_b)
    b_pad = _round_up(B, tb)
    if b_pad != B:
        pad = ((0, b_pad - B), (0, 0))
        x = jnp.pad(x, pad)
        a = jnp.pad(a, pad)
    grid = (b_pad // tb,)

    n_in = n_obs + n_act
    flops = 4 * B * (n_in * hidden + hidden * hidden + hidden)
    bytes_accessed = (
        2 * B * n_in
        + 4 * (n_in * hidden + hidden * hidden)       # 2 critics, bf16 weights
        + 8 * (hidden + hidden + hidden + 1)          # 2 critics, f32 b1/b2/w3/b3
        + 8 * B                                       # out (2 f32 columns)
    )

    out = pl.pallas_call(
        twin_qnetwork_kernel,
        out_shape=jax.ShapeDtypeStruct((2, b_pad, 1), jnp.float32),
        grid_spec=pltpu.PrefetchScalarGridSpec(
            num_scalar_prefetch=0,
            grid=grid,
            in_specs=_batch_input_specs(tb, n_obs, n_act, grid[0]) + [
                pl.BlockSpec((2, n_obs, hidden), lambda i: (0, 0, 0)),
                pl.BlockSpec((2, n_act, hidden), lambda i: (0, 0, 0)),
                pl.BlockSpec((2, 1, hidden), lambda i: (0, 0, 0)),
                pl.BlockSpec((2, hidden, hidden), lambda i: (0, 0, 0)),
                pl.BlockSpec((2, 1, hidden), lambda i: (0, 0, 0)),
                pl.BlockSpec((2, 1, hidden), lambda i: (0, 0, 0)),
                pl.BlockSpec((2, 1, 1), lambda i: (0, 0, 0)),
            ],
            out_specs=pl.BlockSpec((2, tb, 1), lambda i: (0, i, 0)),
        ),
        compiler_params=pltpu.CompilerParams(
            dimension_semantics=("parallel",)),
        cost_estimate=pl.CostEstimate(
            flops=flops, transcendentals=0, bytes_accessed=bytes_accessed),
    )(x, a, w1x, w1a, b1, w2, b2, w3, b3)

    return out[0, :B], out[1, :B]


# ----------------------------------------------------------------------------
# Params (PyTorch nn.Linear default init), stored transposed ([in, out]).
# ----------------------------------------------------------------------------
def init_qnetwork_params(key, n_obs, n_act, hidden=_HIDDEN):
    """U[-1/sqrt(fan_in), +1/sqrt(fan_in)] like torch.nn.Linear.

    w1 is split by input rows into w1x / w1a (for the split-row fc1), w1/w2 are
    stored in bf16; b1/b2/b3 stay f32 and w3 is kept as an f32 (1, hidden) row
    for the VPU fc3.
    """
    n_in = n_obs + n_act
    ks = jax.random.split(key, 6)

    def linear(kw, kb, fan_in, fan_out):
        bound = 1.0 / math.sqrt(fan_in)
        w = jax.random.uniform(kw, (fan_in, fan_out), jnp.float32, -bound, bound)
        b = jax.random.uniform(kb, (1, fan_out), jnp.float32, -bound, bound)
        return w, b

    w1, b1 = linear(ks[0], ks[1], n_in, hidden)
    w2, b2 = linear(ks[2], ks[3], hidden, hidden)
    w3, b3 = linear(ks[4], ks[5], hidden, 1)

    return dict(
        w1x=w1[:n_obs].astype(jnp.bfloat16),
        w1a=w1[n_obs:].astype(jnp.bfloat16),
        b1=b1,
        w2=w2.astype(jnp.bfloat16), b2=b2,
        w3=w3.T,          # (1, hidden) f32
        b3=b3,            # (1, 1) f32
    )


def stack_twin_params(p1, p2):
    """Stack two critics' params along a new leading axis for the fused call."""
    return jax.tree_util.tree_map(lambda u, v: jnp.stack([u, v], axis=0), p1, p2)


def qnetwork_forward_ref(x, a, params):
    """Pure-JAX reference mirroring the kernel's bf16-weight / f32-accum math."""
    xb = x.astype(jnp.bfloat16)
    ab = a.astype(jnp.bfloat16)
    h = (jnp.dot(xb, params["w1x"], preferred_element_type=jnp.float32)
         + jnp.dot(ab, params["w1a"], preferred_element_type=jnp.float32))
    h = jnp.maximum(h + params["b1"], 0.0)
    h = jnp.dot(h.astype(jnp.bfloat16), params["w2"],
                preferred_element_type=jnp.float32)
    h = jnp.maximum(h + params["b2"], 0.0)
    return jnp.sum(h * params["w3"], axis=-1, keepdims=True) + params["b3"]


if __name__ == "__main__":
    key = jax.random.PRNGKey(0)
    k1, k2, kx, ka, kx2, ka2 = jax.random.split(key, 6)

    # --- small smoke test (B=2) ------------------------------------------
    B, n_obs, n_act = 2, 8, 4
    params = init_qnetwork_params(k1, n_obs, n_act, hidden=_HIDDEN)
    x = jax.random.normal(kx, (B, n_obs), jnp.float32)
    a = jax.random.uniform(ka, (B, n_act), jnp.float32, -1.0, 1.0)

    q = jax.block_until_ready(qnetwork_forward(x, a, params))
    assert q.shape == (B, 1)
    q_ref = qnetwork_forward_ref(x, a, params)
    assert jnp.allclose(q, q_ref, atol=1e-4, rtol=1e-4), "small-batch mismatch"

    # --- larger batch: exercises the multi-tile grid + batch padding ------
    B2, n_obs2, n_act2 = 600, 17, 6
    params2 = init_qnetwork_params(k2, n_obs2, n_act2, hidden=_HIDDEN)
    x2 = jax.random.normal(kx2, (B2, n_obs2), jnp.float32)
    a2 = jax.random.uniform(ka2, (B2, n_act2), jnp.float32, -1.0, 1.0)

    q2 = jax.block_until_ready(qnetwork_forward(x2, a2, params2))
    assert q2.shape == (B2, 1)
    q2_ref = qnetwork_forward_ref(x2, a2, params2)
    assert jnp.allclose(q2, q2_ref, atol=1e-3, rtol=1e-3), "large-batch mismatch"

    # --- fused twin-critic call (q1 and q2 in one pallas_call) ------------
    pa = init_qnetwork_params(jax.random.PRNGKey(1), n_obs, n_act, hidden=_HIDDEN)
    pb = init_qnetwork_params(jax.random.PRNGKey(2), n_obs, n_act, hidden=_HIDDEN)
    twin = stack_twin_params(pa, pb)
    qa, qb = twin_qnetwork_forward(x, a, twin)
    qa, qb = jax.block_until_ready((qa, qb))
    assert qa.shape == (B, 1) and qb.shape == (B, 1)
    assert jnp.allclose(qa, qnetwork_forward(x, a, pa), atol=1e-4, rtol=1e-4)
    assert jnp.allclose(qb, qnetwork_forward(x, a, pb), atol=1e-4, rtol=1e-4)

    print("KERNEL_OK")
</pallas_src>

<mosaic_0001>
module attributes {stable_mosaic.version = 11 : i64} {
  func.func @qnetwork_kernel(%arg0: i32, %arg1: memref<8x8xbf16, #tpu.memory_space<vmem>>, %arg2: memref<8x4xbf16, #tpu.memory_space<vmem>>, %arg3: memref<8x256xbf16, #tpu.memory_space<vmem>>, %arg4: memref<4x256xbf16, #tpu.memory_space<vmem>>, %arg5: memref<1x256xf32, #tpu.memory_space<vmem>>, %arg6: memref<256x256xbf16, #tpu.memory_space<vmem>>, %arg7: memref<1x256xf32, #tpu.memory_space<vmem>>, %arg8: memref<1x256xf32, #tpu.memory_space<vmem>>, %arg9: memref<1x1xf32, #tpu.memory_space<vmem>>, %arg10: memref<8x1xf32, #tpu.memory_space<vmem>>) attributes {dimension_semantics = [#tpu.dimension_semantics<parallel>], iteration_bounds = array<i64: 1>, scalar_prefetch = 0 : i64, scratch_operands = 0 : i64, tpu.core_type = #tpu.core_type<tc>, window_params = [{transform_indices = @transform_0, window_bounds = array<i64: 8, 8>}, {transform_indices = @transform_1, window_bounds = array<i64: 8, 4>}, {pipeline_mode = #tpu.pipeline_mode<synchronous>, transform_indices = @transform_2, window_bounds = array<i64: 8, 256>}, {pipeline_mode = #tpu.pipeline_mode<synchronous>, transform_indices = @transform_3, window_bounds = array<i64: 4, 256>}, {pipeline_mode = #tpu.pipeline_mode<synchronous>, transform_indices = @transform_4, window_bounds = array<i64: 1, 256>}, {pipeline_mode = #tpu.pipeline_mode<synchronous>, transform_indices = @transform_5, window_bounds = array<i64: 256, 256>}, {pipeline_mode = #tpu.pipeline_mode<synchronous>, transform_indices = @transform_6, window_bounds = array<i64: 1, 256>}, {pipeline_mode = #tpu.pipeline_mode<synchronous>, transform_indices = @transform_7, window_bounds = array<i64: 1, 256>}, {pipeline_mode = #tpu.pipeline_mode<synchronous>, transform_indices = @transform_8, window_bounds = array<i64: 1, 1>}, {transform_indices = @transform_9, window_bounds = array<i64: 8, 1>}]} {
    %c0 = arith.constant 0 : index
    %c0_0 = arith.constant 0 : index
    %0 = vector.load %arg1[%c0, %c0_0] : memref<8x8xbf16, #tpu.memory_space<vmem>>, vector<8x8xbf16>
    %c0_1 = arith.constant 0 : index
    %c0_2 = arith.constant 0 : index
    %1 = vector.load %arg3[%c0_1, %c0_2] : memref<8x256xbf16, #tpu.memory_space<vmem>>, vector<8x256xbf16>
    %cst = arith.constant dense<0.000000e+00> : vector<8x256xf32>
    %2 = tpu.matmul %0, %1, %cst {dimension_numbers = #tpu.dot_dimension_numbers<[1], [0], [0], [1], [0, 0, 1, 1], [], []>} : vector<8x8xbf16>, vector<8x256xbf16>, vector<8x256xf32> -> vector<8x256xf32>
    %c0_3 = arith.constant 0 : index
    %c0_4 = arith.constant 0 : index
    %3 = vector.load %arg2[%c0_3, %c0_4] : memref<8x4xbf16, #tpu.memory_space<vmem>>, vector<8x4xbf16>
    %c0_5 = arith.constant 0 : index
    %c0_6 = arith.constant 0 : index
    %4 = vector.load %arg4[%c0_5, %c0_6] : memref<4x256xbf16, #tpu.memory_space<vmem>>, vector<4x256xbf16>
    %cst_7 = arith.constant dense<0.000000e+00> : vector<8x256xf32>
    %5 = tpu.matmul %3, %4, %cst_7 {dimension_numbers = #tpu.dot_dimension_numbers<[1], [0], [0], [1], [0, 0, 1, 1], [], []>} : vector<8x4xbf16>, vector<4x256xbf16>, vector<8x256xf32> -> vector<8x256xf32>
    %6 = arith.addf %2, %5 : vector<8x256xf32>
    %c0_8 = arith.constant 0 : index
    %c0_9 = arith.constant 0 : index
    %7 = vector.load %arg5[%c0_8, %c0_9] : memref<1x256xf32, #tpu.memory_space<vmem>>, vector<1x256xf32>
    %8 = vector.broadcast %7 : vector<1x256xf32> to vector<8x256xf32>
    %9 = arith.addf %6, %8 : vector<8x256xf32>
    %cst_10 = arith.constant 0.000000e+00 : f32
    %10 = vector.broadcast %cst_10 : f32 to vector<8x256xf32>
    %11 = arith.maximumf %9, %10 : vector<8x256xf32>
    %12 = arith.truncf %11 : vector<8x256xf32> to vector<8x256xbf16>
    %c0_11 = arith.constant 0 : index
    %c0_12 = arith.constant 0 : index
    %13 = vector.load %arg6[%c0_11, %c0_12] : memref<256x256xbf16, #tpu.memory_space<vmem>>, vector<256x256xbf16>
    %cst_13 = arith.constant dense<0.000000e+00> : vector<8x256xf32>
    %14 = tpu.matmul %12, %13, %cst_13 {dimension_numbers = #tpu.dot_dimension_numbers<[1], [0], [0], [1], [0, 0, 1, 1], [], []>} : vector<8x256xbf16>, vector<256x256xbf16>, vector<8x256xf32> -> vector<8x256xf32>
    %c0_14 = arith.constant 0 : index
    %c0_15 = arith.constant 0 : index
    %15 = vector.load %arg7[%c0_14, %c0_15] : memref<1x256xf32, #tpu.memory_space<vmem>>, vector<1x256xf32>
    %16 = vector.broadcast %15 : vector<1x256xf32> to vector<8x256xf32>
    %17 = arith.addf %14, %16 : vector<8x256xf32>
    %cst_16 = arith.constant 0.000000e+00 : f32
    %18 = vector.broadcast %cst_16 : f32 to vector<8x256xf32>
    %19 = arith.maximumf %17, %18 : vector<8x256xf32>
    %c0_17 = arith.constant 0 : index
    %c0_18 = arith.constant 0 : index
    %20 = vector.load %arg8[%c0_17, %c0_18] : memref<1x256xf32, #tpu.memory_space<vmem>>, vector<1x256xf32>
    %21 = vector.broadcast %20 : vector<1x256xf32> to vector<8x256xf32>
    %22 = arith.mulf %19, %21 : vector<8x256xf32>
    %cst_19 = arith.constant dense<0.000000e+00> : vector<8xf32>
    %23 = vector.multi_reduction <add>, %22, %cst_19 [1] : vector<8x256xf32> to vector<8xf32>
    %24 = vector.shape_cast %23 : vector<8xf32> to vector<8x1xf32>
    %c0_20 = arith.constant 0 : index
    %c0_21 = arith.constant 0 : index
    %25 = vector.load %arg9[%c0_20, %c0_21] : memref<1x1xf32, #tpu.memory_space<vmem>>, vector<1x1xf32>
    %26 = vector.broadcast %25 : vector<1x1xf32> to vector<8x1xf32>
    %27 = arith.addf %24, %26 : vector<8x1xf32>
    %c0_22 = arith.constant 0 : index
    %c0_23 = arith.constant 0 : index
    %28 = vector.load %arg10[%c0_22, %c0_23] : memref<8x1xf32, #tpu.memory_space<vmem>>, vector<8x1xf32>
    tpu.vector_store %arg10[%c0_22, %c0_23], %27 {strides = array<i32>} : memref<8x1xf32, #tpu.memory_space<vmem>>, vector<8x1xf32>,
    return
  }
  func.func @transform_0(%arg0: i32) -> (i32, i32) {
    %c0_i32 = arith.constant 0 : i32
    %c0_i32_0 = arith.constant 0 : i32
    return %arg0, %c0_i32 : i32, i32
  }
  func.func @transform_1(%arg0: i32) -> (i32, i32) {
    %c0_i32 = arith.constant 0 : i32
    %c0_i32_0 = arith.constant 0 : i32
    return %arg0, %c0_i32 : i32, i32
  }
  func.func @transform_2(%arg0: i32) -> (i32, i32) {
    %c0_i32 = arith.constant 0 : i32
    %c0_i32_0 = arith.constant 0 : i32
    %c0_i32_1 = arith.constant 0 : i32
    return %c0_i32, %c0_i32_0 : i32, i32
  }
  func.func @transform_3(%arg0: i32) -> (i32, i32) {
    %c0_i32 = arith.constant 0 : i32
    %c0_i32_0 = arith.constant 0 : i32
    %c0_i32_1 = arith.constant 0 : i32
    return %c0_i32, %c0_i32_0 : i32, i32
  }
  func.func @transform_4(%arg0: i32) -> (i32, i32) {
    %c0_i32 = arith.constant 0 : i32
    %c0_i32_0 = arith.constant 0 : i32
    %c0_i32_1 = arith.constant 0 : i32
    return %c0_i32, %c0_i32_0 : i32, i32
  }
  func.func @transform_5(%arg0: i32) -> (i32, i32) {
    %c0_i32 = arith.constant 0 : i32
    %c0_i32_0 = arith.constant 0 : i32
    %c0_i32_1 = arith.constant 0 : i32
    return %c0_i32, %c0_i32_0 : i32, i32
  }
  func.func @transform_6(%arg0: i32) -> (i32, i32) {
    %c0_i32 = arith.constant 0 : i32
    %c0_i32_0 = arith.constant 0 : i32
    %c0_i32_1 = arith.constant 0 : i32
    return %c0_i32, %c0_i32_0 : i32, i32
  }
  func.func @transform_7(%arg0: i32) -> (i32, i32) {
    %c0_i32 = arith.constant 0 : i32
    %c0_i32_0 = arith.constant 0 : i32
    %c0_i32_1 = arith.constant 0 : i32
    return %c0_i32, %c0_i32_0 : i32, i32
  }
  func.func @transform_8(%arg0: i32) -> (i32, i32) {
    %c0_i32 = arith.constant 0 : i32
    %c0_i32_0 = arith.constant 0 : i32
    %c0_i32_1 = arith.constant 0 : i32
    return %c0_i32, %c0_i32_0 : i32, i32
  }
  func.func @transform_9(%arg0: i32) -> (i32, i32) {
    %c0_i32 = arith.constant 0 : i32
    %c0_i32_0 = arith.constant 0 : i32
    return %arg0, %c0_i32 : i32, i32
  }
}

</mosaic_0001>

<llo_original>
// kernel: tpu_custom_call.1
$region0: #{tpu_custom_call.1}
  #allocation0 [shape = 'u32[]', space=smem, size = 0x4, offset = 0x4, fixed_abs, tag = 'smem constant byte address 0x4 - core index']
  #allocation1 [shape = 'u32[72,128]{1,0:T(1,128)}', space=vmem, size = 0x9000, scoped, tag = 'internal scratch']
  #allocation2 [shape = 'f32[1,1]{1,0:T(1,128)S(1)}', space=vmem, size = 0x200, scoped, tag = 'scoped memory for tpu_custom_call.1']
  %s0 = inlined_call_operand.hbm [shape: bf16[8,8], index: 0, kind: input, shape index: {}]
  %s1 = inlined_call_operand.vmem [shape: bf16[8,4], index: 1, kind: input, shape index: {}]
  %s2 = inlined_call_operand.vmem [shape: bf16[8,256], index: 2, kind: input, shape index: {}]
  %s3 = inlined_call_operand.hbm [shape: bf16[4,256], index: 3, kind: input, shape index: {}]
  %s4 = inlined_call_operand.vmem [shape: f32[1,256], index: 4, kind: input, shape index: {}]
  %s5 = inlined_call_operand.hbm [shape: bf16[256,256], index: 5, kind: input, shape index: {}]
  %s6 = inlined_call_operand.vmem [shape: f32[1,256], index: 6, kind: input, shape index: {}]
  %s7 = inlined_call_operand.vmem [shape: f32[1,256], index: 7, kind: input, shape index: {}]
  %s8 = inlined_call_operand.<no memory space> [shape: f32[1,1], index: 8, kind: input, shape index: {}]
  %s9 = inlined_call_operand.vmem [shape: f32[8,1], index: 9, kind: output, shape index: {}]
  %s10 = sld [smem:[#allocation0]]
  $region58: #{tpu_custom_call.1} parent=0
    _
  %s12 = ssub.s32 1, %s10
  %s13 = scalar_select 0, %s12, %s10
  %v14 = vstv %s8
  %15 = vst [vmem:[#allocation2] sm:$0x1] %v14
  $region1: #{tpu_custom_call.1} parent=0
    #allocation3 [shape = 'u8[2048]{0}', space=vmem, size = 0x800, scoped, tag = 'input window, operand 0, single buffered']
    #allocation4 [shape = 's32[1]{0}', space=sflag, size = 0x4, scoped, tag = 'scoped memory for tpu_custom_call.1']
    #allocation5 [shape = 'u8[2048]{0}', space=vmem, size = 0x800, scoped, tag = 'input window, operand 3, single buffered']
    #allocation6 [shape = 's32[1]{0}', space=sflag, size = 0x4, scoped, tag = 'scoped memory for tpu_custom_call.1']
    #allocation7 [shape = 'u8[131072]{0}', space=vmem, size = 0x20000, scoped, tag = 'input window, operand 5, single buffered']
    %16 = vsyncpa [#allocation4], 0
    %17 = vsyncpa [#allocation6], 0
    // Predicated region
    $region2: #{tpu_custom_call.1} parent=1 // pred_check
      _
    $region3: #{tpu_custom_call.1} parent=1 // pred_check_branch
      %19 = sbr.rel (0) target = $region5
    $region4: #{tpu_custom_call.1} parent=1 // pred_region
      %21 = vsyncadd [#allocation4], 0
      %s23 = sshll.u32 %s0, 4
      %s24 = int_to_ptr.hbm [resolvable:$true] %s23
      %s25 = sshll.u32 [#allocation3], 4
      %s26 = int_to_ptr.vmem [resolvable:$true] %s25
      %28 = dma.hbm_to_vmem [thread:$0]  %s24, 64, %s26, [#allocation4]
    $region5: #{tpu_custom_call.1} parent=1 // pred_fallthru
      _
    // Predicated region
    $region6: #{tpu_custom_call.1} parent=1 // pred_check
      _
    $region7: #{tpu_custom_call.1} parent=1 // pred_check_branch
      %30 = sbr.rel (0) target = $region9
    $region8: #{tpu_custom_call.1} parent=1 // pred_region
      _
    $region9: #{tpu_custom_call.1} parent=1 // pred_fallthru
      _
    // Predicated region
    $region10: #{tpu_custom_call.1} parent=1 // pred_check
      _
    $region11: #{tpu_custom_call.1} parent=1 // pred_check_branch
      %32 = sbr.rel (0) target = $region13
    $region12: #{tpu_custom_call.1} parent=1 // pred_region
      _
    $region13: #{tpu_custom_call.1} parent=1 // pred_fallthru
      _
    // Predicated region
    $region14: #{tpu_custom_call.1} parent=1 // pred_check
      _
    $region15: #{tpu_custom_call.1} parent=1 // pred_check_branch
      %34 = sbr.rel (0) target = $region17
    $region16: #{tpu_custom_call.1} parent=1 // pred_region
      %36 = vsyncadd [#allocation6], 0
      %s38 = sshll.u32 %s3, 4
      %s39 = int_to_ptr.hbm [resolvable:$true] %s38
      %s40 = sshll.u32 [#allocation5], 4
      %s41 = int_to_ptr.vmem [resolvable:$true] %s40
      %43 = dma.hbm_to_vmem [thread:$0]  %s39, 64, %s41, [#allocation6]
    $region17: #{tpu_custom_call.1} parent=1 // pred_fallthru
      _
    // Predicated region
    $region18: #{tpu_custom_call.1} parent=1 // pred_check
      _
    $region19: #{tpu_custom_call.1} parent=1 // pred_check_branch
      %45 = sbr.rel (0) target = $region21
    $region20: #{tpu_custom_call.1} parent=1 // pred_region
      _
    $region21: #{tpu_custom_call.1} parent=1 // pred_fallthru
      _
    // Predicated region
    $region22: #{tpu_custom_call.1} parent=1 // pred_check
      _
    $region23: #{tpu_custom_call.1} parent=1 // pred_check_branch
      %47 = sbr.rel (0) target = $region25
    $region24: #{tpu_custom_call.1} parent=1 // pred_region
      %49 = vsyncadd [#allocation6], 0
      %s50 = sshll.u32 %s5, 4
      %s51 = int_to_ptr.hbm [resolvable:$true] %s50
      %s52 = sshll.u32 [#allocation7], 4
      %s53 = int_to_ptr.vmem [resolvable:$true] %s52
      %58 = dma.hbm_to_vmem [thread:$0]  %s51, 4096, %s53, [#allocation6], 128, 128, 8
    $region25: #{tpu_custom_call.1} parent=1 // pred_fallthru
      _
    // Predicated region
    $region26: #{tpu_custom_call.1} parent=1 // pred_check
      _
    $region27: #{tpu_custom_call.1} parent=1 // pred_check_branch
      %60 = sbr.rel (0) target = $region29
    $region28: #{tpu_custom_call.1} parent=1 // pred_region
      _
    $region29: #{tpu_custom_call.1} parent=1 // pred_fallthru
      _
    // Predicated region
    $region30: #{tpu_custom_call.1} parent=1 // pred_check
      _
    $region31: #{tpu_custom_call.1} parent=1 // pred_check_branch
      %62 = sbr.rel (0) target = $region33
    $region32: #{tpu_custom_call.1} parent=1 // pred_region
      _
    $region33: #{tpu_custom_call.1} parent=1 // pred_fallthru
      _
    // Predicated region
    $region34: #{tpu_custom_call.1} parent=1 // pred_check
      _
    $region35: #{tpu_custom_call.1} parent=1 // pred_check_branch
      %64 = sbr.rel (0) target = $region37
    $region36: #{tpu_custom_call.1} parent=1 // pred_region
      _
    $region37: #{tpu_custom_call.1} parent=1 // pred_fallthru
      _
    // Predicated region
    $region38: #{tpu_custom_call.1} parent=1 // pred_check
      _
    $region39: #{tpu_custom_call.1} parent=1 // pred_check_branch
      %66 = sbr.rel (0) target = $region41
    $region40: #{tpu_custom_call.1} parent=1 // pred_region
      %68 = dma.done [#allocation4], 64
    $region41: #{tpu_custom_call.1} parent=1 // pred_fallthru
      _
    // Predicated region
    $region42: #{tpu_custom_call.1} parent=1 // pred_check
      _
    $region43: #{tpu_custom_call.1} parent=1 // pred_check_branch
      %70 = sbr.rel (0) target = $region45
    $region44: #{tpu_custom_call.1} parent=1 // pred_region
      %72 = dma.done [#allocation6], 64
    $region45: #{tpu_custom_call.1} parent=1 // pred_fallthru
      _
    // Predicated region
    $region46: #{tpu_custom_call.1} parent=1 // pred_check
      _
    $region47: #{tpu_custom_call.1} parent=1 // pred_check_branch
      %74 = sbr.rel (0) target = $region49
    $region48: #{tpu_custom_call.1} parent=1 // pred_region
      %76 = dma.done [#allocation6], 4096
    $region49: #{tpu_custom_call.1} parent=1 // pred_fallthru
      _
    %v78 = vld [vmem:[#allocation3] sm:$0xf]
    %v79 = vld [vmem:[%s2] sm:$0xff]
    %v80 = vld [vmem:[%s1] sm:$0xf]
    %v81 = vld [vmem:[#allocation5] sm:$0xf]
    %83 = vst [vmem:[#allocation1] ss:$4 sm:$0xff] %v81
    %v84 = vld.sshfl [vmem:[#allocation1] sm:$0xff pattern:$0x73625140]
    %v85 = vld.sshfl [vmem:[#allocation1 + $0x8] sm:$0xff pattern:$0x73625140]
    %vm86 = vcmask 31744
    %v88 = vsel %vm86, %v80, 0
    %vm90 = vcmask 1041408
    %v91 = vsel %vm90, %v84, 0
    %v93 = vsel %vm90, %v85, 0
    %95 = vmatpush.bf16.msra.mxu0 0
    %96 = vmatpush.bf16.msra.mxu0 0
    %97 = vmatpush.bf16.msra.mxu0 0
    %98 = vmatpush.bf16.msra.mxu0 0
    %99 = vmatpush.bf16.msra.mxu0 0
    %100 = vmatpush.bf16.msra.mxu0 0
    %101 = vmatpush.bf16.msra.mxu0 0
    %102 = vmatpush.bf16.msra.mxu0 %v91
    %103 = vmatmul.bf16.gmra.mxu0 %v88
    %v104 = vpop.f32.mrf.mxu0
    %v105 = vadd.f32 0.0, %v104
    %v106 = vpop.f32.mrf.mxu0
    %107 = vdwg.mxu0
    %108 = vmatpush.bf16.msra.mxu0 0
    %109 = vmatpush.bf16.msra.mxu0 0
    %110 = vmatpush.bf16.msra.mxu0 0
    %111 = vmatpush.bf16.msra.mxu0 0
    %112 = vmatpush.bf16.msra.mxu0 0
    %113 = vmatpush.bf16.msra.mxu0 0
    %114 = vmatpush.bf16.msra.mxu0 0
    %115 = vmatpush.bf16.msra.mxu0 %v93
    %116 = vmatmul.bf16.gmra.mxu0 %v88
    %v117 = vpop.f32.mrf.mxu0
    %v118 = vadd.f32 0.0, %v117
    %v119 = vpop.f32.mrf.mxu0
    %120 = vdwg.mxu0
    %v122 = vunpack.c.l.b16 %v79
    %v123 = vunpack.c.h.b16 %v79
    %v124 = vpack.c.b16 %v122, %v122
    %v125 = vpack.c.b16 %v123, %v123
    %vm126 = vcmask 64512
    %v128 = vsel %vm126, %v78, 0
    %vm130 = vcmask 1043456
    %v132 = vsel %vm130, %v124, 0
    %v135 = vsel %vm130, %v125, 0
    %137 = vmatpush.bf16.msra.mxu0 0
    %138 = vmatpush.bf16.msra.mxu0 0
    %139 = vmatpush.bf16.msra.mxu0 0
    %140 = vmatpush.bf16.msra.mxu0 0
    %141 = vmatpush.bf16.msra.mxu0 0
    %142 = vmatpush.bf16.msra.mxu0 0
    %143 = vmatpush.bf16.msra.mxu0 0
    %144 = vmatpush.bf16.msra.mxu0 %v132
    %145 = vmatmul.bf16.gmra.mxu0 %v128
    %v146 = vpop.f32.mrf.mxu0
    %v147 = vadd.f32 %v105, %v146
    %v148 = vpop.f32.mrf.mxu0
    %149 = vdwg.mxu0
    %150 = vmatpush.bf16.msra.mxu0 0
    %151 = vmatpush.bf16.msra.mxu0 0
    %152 = vmatpush.bf16.msra.mxu0 0
    %153 = vmatpush.bf16.msra.mxu0 0
    %154 = vmatpush.bf16.msra.mxu0 0
    %155 = vmatpush.bf16.msra.mxu0 0
    %156 = vmatpush.bf16.msra.mxu0 0
    %157 = vmatpush.bf16.msra.mxu0 %v135
    %158 = vmatmul.bf16.gmra.mxu0 %v128
    %v159 = vpop.f32.mrf.mxu0
    %v160 = vadd.f32 %v118, %v159
    %v161 = vpop.f32.mrf.mxu0
    %162 = vdwg.mxu0
    %v163 = vld [vmem:[%s4] sm:$0x3]
    %v165 = vperm.slane %v163, 0
    %v166 = vperm.slane %v163, 1
    %v169 = vadd.f32 %v147, %v165
    %v170 = vadd.f32 %v160, %v166
    %v171 = vmax.f32 %v169, 0.0
    %v172 = vmax.f32 %v170, 0.0
    %v173 = vpack.c.bf16 %v171, %v171
    %v174 = vpack.c.bf16 %v172, %v172
    %v175 = vld [vmem:[#allocation7] sm:$0xff]
    %v176 = vld [vmem:[#allocation7 + $0x8] sm:$0xff]
    %v177 = vld [vmem:[#allocation7 + $0x10] sm:$0xff]
    %v178 = vld [vmem:[#allocation7 + $0x18] sm:$0xff]
    %v179 = vld [vmem:[#allocation7 + $0x20] sm:$0xff]
    %v180 = vld [vmem:[#allocation7 + $0x28] sm:$0xff]
    %v181 = vld [vmem:[#allocation7 + $0x30] sm:$0xff]
    %v182 = vld [vmem:[#allocation7 + $0x38] sm:$0xff]
    %v183 = vld [vmem:[#allocation7 + $0x40] sm:$0xff]
    %v184 = vld [vmem:[#allocation7 + $0x48] sm:$0xff]
    %v185 = vld [vmem:[#allocation7 + $0x50] sm:$0xff]
    %v186 = vld [vmem:[#allocation7 + $0x58] sm:$0xff]
    %v187 = vld [vmem:[#allocation7 + $0x60] sm:$0xff]
    %v188 = vld [vmem:[#allocation7 + $0x68] sm:$0xff]
    %v189 = vld [vmem:[#allocation7 + $0x70] sm:$0xff]
    %v190 = vld [vmem:[#allocation7 + $0x78] sm:$0xff]
    %v191 = vld [vmem:[#allocation7 + $0x80] sm:$0xff]
    %v192 = vld [vmem:[#allocation7 + $0x88] sm:$0xff]
    %v193 = vld [vmem:[#allocation7 + $0x90] sm:$0xff]
    %v194 = vld [vmem:[#allocation7 + $0x98] sm:$0xff]
    %v195 = vld [vmem:[#allocation7 + $0xa0] sm:$0xff]
    %v196 = vld [vmem:[#allocation7 + $0xa8] sm:$0xff]
    %v197 = vld [vmem:[#allocation7 + $0xb0] sm:$0xff]
    %v198 = vld [vmem:[#allocation7 + $0xb8] sm:$0xff]
    %v199 = vld [vmem:[#allocation7 + $0xc0] sm:$0xff]
    %v200 = vld [vmem:[#allocation7 + $0xc8] sm:$0xff]
    %v201 = vld [vmem:[#allocation7 + $0xd0] sm:$0xff]
    %v202 = vld [vmem:[#allocation7 + $0xd8] sm:$0xff]
    %v203 = vld [vmem:[#allocation7 + $0xe0] sm:$0xff]
    %v204 = vld [vmem:[#allocation7 + $0xe8] sm:$0xff]
    %v205 = vld [vmem:[#allocation7 + $0xf0] sm:$0xff]
    %v206 = vld [vmem:[#allocation7 + $0xf8] sm:$0xff]
    %v207 = vld [vmem:[%s6] sm:$0x3]
    %v209 = vperm.slane %v207, 0
    %v210 = vperm.slane %v207, 1
    %v245 = vunpack.c.l.b16 %v175
    %v246 = vunpack.c.h.b16 %v175
    %v247 = vunpack.c.l.b16 %v176
    %v248 = vunpack.c.h.b16 %v176
    %v249 = vunpack.c.l.b16 %v177
    %v250 = vunpack.c.h.b16 %v177
    %v251 = vunpack.c.l.b16 %v178
    %v252 = vunpack.c.h.b16 %v178
    %v253 = vunpack.c.l.b16 %v179
    %v254 = vunpack.c.h.b16 %v179
    %v255 = vunpack.c.l.b16 %v180
    %v256 = vunpack.c.h.b16 %v180
    %v257 = vunpack.c.l.b16 %v181
    %v258 = vunpack.c.h.b16 %v181
    %v259 = vunpack.c.l.b16 %v182
    %v260 = vunpack.c.h.b16 %v182
    %v261 = vunpack.c.l.b16 %v183
    %v262 = vunpack.c.h.b16 %v183
    %v263 = vunpack.c.l.b16 %v184
    %v264 = vunpack.c.h.b16 %v184
    %v265 = vunpack.c.l.b16 %v185
    %v266 = vunpack.c.h.b16 %v185
    %v267 = vunpack.c.l.b16 %v186
    %v268 = vunpack.c.h.b16 %v186
    %v269 = vunpack.c.l.b16 %v187
    %v270 = vunpack.c.h.b16 %v187
    %v271 = vunpack.c.l.b16 %v188
    %v272 = vunpack.c.h.b16 %v188
    %v273 = vunpack.c.l.b16 %v189
    %v274 = vunpack.c.h.b16 %v189
    %v275 = vunpack.c.l.b16 %v190
    %v276 = vunpack.c.h.b16 %v190
    %v277 = vunpack.c.l.b16 %v191
    %v278 = vunpack.c.h.b16 %v191
    %v279 = vunpack.c.l.b16 %v192
    %v280 = vunpack.c.h.b16 %v192
    %v281 = vunpack.c.l.b16 %v193
    %v282 = vunpack.c.h.b16 %v193
    %v283 = vunpack.c.l.b16 %v194
    %v284 = vunpack.c.h.b16 %v194
    %v285 = vunpack.c.l.b16 %v195
    %v286 = vunpack.c.h.b16 %v195
    %v287 = vunpack.c.l.b16 %v196
    %v288 = vunpack.c.h.b16 %v196
    %v289 = vunpack.c.l.b16 %v197
    %v290 = vunpack.c.h.b16 %v197
    %v291 = vunpack.c.l.b16 %v198
    %v292 = vunpack.c.h.b16 %v198
    %v293 = vunpack.c.l.b16 %v199
    %v294 = vunpack.c.h.b16 %v199
    %v295 = vunpack.c.l.b16 %v200
    %v296 = vunpack.c.h.b16 %v200
    %v297 = vunpack.c.l.b16 %v201
    %v298 = vunpack.c.h.b16 %v201
    %v299 = vunpack.c.l.b16 %v202
    %v300 = vunpack.c.h.b16 %v202
    %v301 = vunpack.c.l.b16 %v203
    %v302 = vunpack.c.h.b16 %v203
    %v303 = vunpack.c.l.b16 %v204
    %v304 = vunpack.c.h.b16 %v204
    %v305 = vunpack.c.l.b16 %v205
    %v306 = vunpack.c.h.b16 %v205
    %v307 = vunpack.c.l.b16 %v206
    %v308 = vunpack.c.h.b16 %v206
    %v309 = vpack.c.b16 %v247, %v245
    %v310 = vpack.c.b16 %v248, %v246
    %v311 = vpack.c.b16 %v251, %v249
    %v312 = vpack.c.b16 %v252, %v250
    %v313 = vpack.c.b16 %v255, %v253
    %v314 = vpack.c.b16 %v256, %v254
    %v315 = vpack.c.b16 %v259, %v257
    %v316 = vpack.c.b16 %v260, %v258
    %v317 = vpack.c.b16 %v263, %v261
    %v318 = vpack.c.b16 %v264, %v262
    %v319 = vpack.c.b16 %v267, %v265
    %v320 = vpack.c.b16 %v268, %v266
    %v321 = vpack.c.b16 %v271, %v269
    %v322 = vpack.c.b16 %v272, %v270
    %v323 = vpack.c.b16 %v275, %v273
    %v324 = vpack.c.b16 %v276, %v274
    %v325 = vpack.c.b16 %v279, %v277
    %v326 = vpack.c.b16 %v280, %v278
    %v327 = vpack.c.b16 %v283, %v281
    %v328 = vpack.c.b16 %v284, %v282
    %v329 = vpack.c.b16 %v287, %v285
    %v330 = vpack.c.b16 %v288, %v286
    %v331 = vpack.c.b16 %v291, %v289
    %v332 = vpack.c.b16 %v292, %v290
    %v333 = vpack.c.b16 %v295, %v293
    %v334 = vpack.c.b16 %v296, %v294
    %v335 = vpack.c.b16 %v299, %v297
    %v336 = vpack.c.b16 %v300, %v298
    %v337 = vpack.c.b16 %v303, %v301
    %v338 = vpack.c.b16 %v304, %v302
    %v339 = vpack.c.b16 %v307, %v305
    %v340 = vpack.c.b16 %v308, %v306
    %373 = vmatpush.bf16.msra.mxu0 %v323
    %374 = vmatpush.bf16.msra.mxu0 %v321
    %375 = vmatpush.bf16.msra.mxu0 %v319
    %376 = vmatpush.bf16.msra.mxu0 %v317
    %377 = vmatpush.bf16.msra.mxu0 %v315
    %378 = vmatpush.bf16.msra.mxu0 %v313
    %379 = vmatpush.bf16.msra.mxu0 %v311
    %380 = vmatpush.bf16.msra.mxu0 %v309
    %381 = vmatmul.bf16.gmra.mxu0 %v173
    %v382 = vpop.f32.mrf.mxu0
    %v383 = vadd.f32 %v209, %v382
    %v384 = vpop.f32.mrf.mxu0
    %385 = vdwg.mxu0
    %386 = vmatpush.bf16.msra.mxu0 %v339
    %387 = vmatpush.bf16.msra.mxu0 %v337
    %388 = vmatpush.bf16.msra.mxu0 %v335
    %389 = vmatpush.bf16.msra.mxu0 %v333
    %390 = vmatpush.bf16.msra.mxu0 %v331
    %391 = vmatpush.bf16.msra.mxu0 %v329
    %392 = vmatpush.bf16.msra.mxu0 %v327
    %393 = vmatpush.bf16.msra.mxu0 %v325
    %394 = vmatmul.bf16.gmra.mxu0 %v174
    %v395 = vpop.f32.mrf.mxu0
    %v396 = vadd.f32 %v383, %v395
    %v397 = vpop.f32.mrf.mxu0
    %398 = vdwg.mxu0
    %399 = vmatpush.bf16.msra.mxu0 %v324
    %400 = vmatpush.bf16.msra.mxu0 %v322
    %401 = vmatpush.bf16.msra.mxu0 %v320
    %402 = vmatpush.bf16.msra.mxu0 %v318
    %403 = vmatpush.bf16.msra.mxu0 %v316
    %404 = vmatpush.bf16.msra.mxu0 %v314
    %405 = vmatpush.bf16.msra.mxu0 %v312
    %406 = vmatpush.bf16.msra.mxu0 %v310
    %407 = vmatmul.bf16.gmra.mxu0 %v173
    %v408 = vpop.f32.mrf.mxu0
    %v409 = vadd.f32 %v210, %v408
    %v410 = vpop.f32.mrf.mxu0
    %411 = vdwg.mxu0
    %412 = vmatpush.bf16.msra.mxu0 %v340
    %413 = vmatpush.bf16.msra.mxu0 %v338
    %414 = vmatpush.bf16.msra.mxu0 %v336
    %415 = vmatpush.bf16.msra.mxu0 %v334
    %416 = vmatpush.bf16.msra.mxu0 %v332
    %417 = vmatpush.bf16.msra.mxu0 %v330
    %418 = vmatpush.bf16.msra.mxu0 %v328
    %419 = vmatpush.bf16.msra.mxu0 %v326
    %420 = vmatmul.bf16.gmra.mxu0 %v174
    %v421 = vpop.f32.mrf.mxu0
    %v422 = vadd.f32 %v409, %v421
    %v423 = vpop.f32.mrf.mxu0
    %424 = vdwg.mxu0
    %v425 = vmax.f32 %v396, 0.0
    %v426 = vmax.f32 %v422, 0.0
    %v427 = vld [vmem:[%s7] sm:$0x3]
    %v429 = vperm.slane %v427, 0
    %v430 = vperm.slane %v427, 1
    %v433 = vmul.f32 %v425, %v429
    %v434 = vmul.f32 %v426, %v430
    %v435 = vadd.f32 %v433, %v434
    %436 = vadd.xlane.f32.xlu0 %v435
    %v437 = vpop.xlane.xlu0 %436
    %v438 = vld [vmem:[#allocation2] sm:$0x1]
    %v440 = vperm.slane %v438, 0
    %v442 = vadd.f32 %v437, %v440
    %vm443 = vcmask 7168
    %444 = vst.msk [vmem:[%s9] sm:$0xff] %vm443, %v442
    // Predicated region
    $region50: #{tpu_custom_call.1} parent=1 // pred_check
      _
    $region51: #{tpu_custom_call.1} parent=1 // pred_check_branch
      %446 = sbr.rel (0) target = $region53
    $region52: #{tpu_custom_call.1} parent=1 // pred_region
      _
    $region53: #{tpu_custom_call.1} parent=1 // pred_fallthru
      _
    // Predicated region
    $region54: #{tpu_custom_call.1} parent=1 // pred_check
      _
    $region55: #{tpu_custom_call.1} parent=1 // pred_check_branch
      %448 = sbr.rel (0) target = $region57
    $region56: #{tpu_custom_call.1} parent=1 // pred_region
      _
    $region57: #{tpu_custom_call.1} parent=1 // pred_fallthru
      _
    %449 = vsyncpa [#allocation4], 1
    %450 = vsyncpa [#allocation6], 1

</llo_original>
